<compile_context>
chip_gen: v6e
topology: v6e:2x2x1
jax: 0.10.0
libtpu: 0.0.40
codegen_flags: <defaults>
</compile_context>

<pallas_src>
import jax
import jax.numpy as jnp
from jax import lax
from jax.experimental import pallas as pl
from jax.experimental.pallas import tpu as pltpu

# Model hyper-parameters (consistent with SkipGram.__init__).
VOCAB_SIZE = 64    # features.vocabulary.size
EMBED_DIM = 32     # features.embedding_dim
HIDDEN_DIM = 32    # hidden_layers

# Padded (lane-dense) internal dims; last column of the fused matrix is a
# "ones" column that carries b2 through the second matmul.
VP = 128           # padded vocab (one-hot / logits lane width)
HP = 128           # padded hidden (+ ones column at HP-1)

NEG_BIG = -1e30    # mask value for padded vocab lanes -> excluded from LSE


def _skipgram_kernel(idx_ref, fused_ref, w2_ref, out_ref):
    """One batch tile: fused (embedding+Linear1) gather + ReLU + Linear2 + log_softmax.

    idx_ref   : (TB, 1)  int32  word indices for this tile (streams per step)
    fused_ref : (VP, HP) bf16   emb @ W1 + b1 (padded); col HP-1 == 1.0
    w2_ref    : (HP, VP) bf16   padded W2; b2 folded into row HP-1
    out_ref   : (TB, VP) f32    log-probs (padded vocab lanes hold junk)
    """
    idx = idx_ref[...]                                                  # (TB, 1)
    lanes = lax.broadcasted_iota(jnp.int32, (idx.shape[0], fused_ref.shape[0]), 1)
    onehot = (lanes == idx).astype(jnp.bfloat16)                        # (TB, VP)

    # Fused embedding lookup + first Linear (gather via one-hot MXU matmul),
    # then ReLU.  Col HP-1 of `fused` is 1.0 so h[:, HP-1] == 1.0 after relu,
    # which carries b2 through the second matmul.
    h = jnp.maximum(
        jnp.dot(onehot, fused_ref[...], preferred_element_type=jnp.float32),
        0.0)                                                            # (TB, HP)

    # Output logits: h @ W2 (+ b2 via the ones column of h).
    logits = jnp.dot(h.astype(jnp.bfloat16), w2_ref[...],
                     preferred_element_type=jnp.float32)                # (TB, VP)

    # Mask padded vocab lanes in f32 (robust vs. folding -1e30 into bf16 W2).
    lane = lax.broadcasted_iota(jnp.int32, logits.shape, 1)
    logits = jnp.where(lane < VOCAB_SIZE, logits, NEG_BIG)

    # Numerically-stable log_softmax along the lane-dense vocab axis.
    m = jnp.max(logits, axis=-1, keepdims=True)
    s = logits - m
    lse = jnp.log(jnp.sum(jnp.exp(s), axis=-1, keepdims=True))
    out_ref[...] = s - lse


def _pack_params(emb_table, w1, b1, w2, b2):
    """Fold Embedding + Linear1 (f32), pad to 128-wide bf16 blocks, fold b2."""
    V, E = emb_table.shape
    H = w1.shape[1]

    # Exact fold (ReLU comes after W1): fused[v, :] = emb[v] @ W1 + b1.
    fused = (emb_table.astype(jnp.float32) @ w1.astype(jnp.float32)
             + b1.astype(jnp.float32).reshape(1, -1))                   # (V, H)

    fused_p = jnp.zeros((VP, HP), jnp.float32).at[:V, :H].set(fused)
    fused_p = fused_p.at[:V, HP - 1].set(1.0)          # ones column -> folds b2

    w2_p = jnp.zeros((HP, VP), jnp.float32).at[:H, :V].set(w2)
    w2_p = w2_p.at[HP - 1, :V].set(b2.reshape(-1))     # b2 lives in the ones-row

    return fused_p.astype(jnp.bfloat16), w2_p.astype(jnp.bfloat16)


def _pick_tb(batch):
    """Largest batch tile <= 1024 that still leaves >= 2 grid steps (v7x megacore)."""
    half_tiles = pl.cdiv(pl.cdiv(batch, 2), 128)
    return int(max(128, min(1024, half_tiles * 128)))


@jax.jit
def skipgram_forward_padded(word_idx, emb_table, w1, b1, w2, b2):
    """SkipGram forward. Returns padded (b_pad, 128) f32 log-probs.

    Fused consumers (e.g. NLL gather) should read this block directly instead
    of materializing a (B, V) slice (saves an HBM round trip).
    """
    B = word_idx.shape[0]
    fused_p, w2_p = _pack_params(emb_table, w1, b1, w2, b2)

    tb = _pick_tb(B)
    b_pad = pl.cdiv(B, tb) * tb
    nb = b_pad // tb
    idx2d = jnp.zeros((b_pad, 1), jnp.int32).at[:B, 0].set(word_idx.astype(jnp.int32))

    return pl.pallas_call(
        _skipgram_kernel,
        out_shape=jax.ShapeDtypeStruct((b_pad, VP), jnp.float32),
        grid_spec=pltpu.PrefetchScalarGridSpec(
            num_scalar_prefetch=0,
            grid=(nb,),
            in_specs=[
                pl.BlockSpec((tb, 1), lambda i: (i, 0)),    # word indices (stream)
                pl.BlockSpec((VP, HP), lambda i: (0, 0)),   # emb@W1+b1 (resident)
                pl.BlockSpec((HP, VP), lambda i: (0, 0)),   # W2+b2     (resident)
            ],
            out_specs=pl.BlockSpec((tb, VP), lambda i: (i, 0)),
        ),
        compiler_params=pltpu.CompilerParams(
            dimension_semantics=("parallel",),              # v7x megacore sharding
        ),
    )(idx2d, fused_p, w2_p)


def skipgram_forward(word_idx, emb_table, w1, b1, w2, b2):
    """Module-equivalent forward: (B, VOCAB_SIZE) log-probabilities."""
    out_padded = skipgram_forward_padded(word_idx, emb_table, w1, b1, w2, b2)
    return out_padded[:word_idx.shape[0], :emb_table.shape[0]]


def _reference_forward(word_idx, emb_table, w1, b1, w2, b2):
    x = jnp.take(emb_table, word_idx, axis=0)
    h = jnp.maximum(x @ w1 + b1, 0.0)
    logits = h @ w2 + b2
    return jax.nn.log_softmax(logits, axis=-1)


if __name__ == "__main__":
    key = jax.random.PRNGKey(0)
    k_emb, k_w1, k_b1, k_w2, k_b2, k_idx = jax.random.split(key, 6)

    BATCH = 512   # -> TB=256, 2 grid steps (megacore-shardable on v7x)

    emb_table = jax.random.normal(k_emb, (VOCAB_SIZE, EMBED_DIM), jnp.float32) * 0.1
    w1 = jax.random.normal(k_w1, (EMBED_DIM, HIDDEN_DIM), jnp.float32) * 0.1
    b1 = jax.random.normal(k_b1, (HIDDEN_DIM,), jnp.float32) * 0.01
    w2 = jax.random.normal(k_w2, (HIDDEN_DIM, VOCAB_SIZE), jnp.float32) * 0.1
    b2 = jax.random.normal(k_b2, (VOCAB_SIZE,), jnp.float32) * 0.01
    word_idx = jax.random.randint(k_idx, (BATCH,), 0, VOCAB_SIZE, jnp.int32)

    out_padded = jax.block_until_ready(
        skipgram_forward_padded(word_idx, emb_table, w1, b1, w2, b2))
    out = out_padded[:BATCH, :VOCAB_SIZE]   # slice only for verification
    ref = _reference_forward(word_idx, emb_table, w1, b1, w2, b2)

    assert out.shape == (BATCH, VOCAB_SIZE), out.shape
    # bf16 MXU operands (f32 accumulation) vs. pure-f32 reference -> modest tol.
    max_err = float(jnp.max(jnp.abs(out - ref)))
    assert jnp.allclose(out, ref, atol=2e-2, rtol=2e-2), f"max abs err {max_err}"

    print("KERNEL_OK")
</pallas_src>

<mosaic_0001>
module attributes {stable_mosaic.version = 11 : i64} {
  func.func @_skipgram_kernel(%arg0: i32, %arg1: memref<256x1xi32, #tpu.memory_space<vmem>>, %arg2: memref<128x128xbf16, #tpu.memory_space<vmem>>, %arg3: memref<128x128xbf16, #tpu.memory_space<vmem>>, %arg4: memref<256x128xf32, #tpu.memory_space<vmem>>) attributes {dimension_semantics = [#tpu.dimension_semantics<parallel>], iteration_bounds = array<i64: 2>, scalar_prefetch = 0 : i64, scratch_operands = 0 : i64, tpu.core_type = #tpu.core_type<tc>, window_params = [{transform_indices = @transform_0, window_bounds = array<i64: 256, 1>}, {pipeline_mode = #tpu.pipeline_mode<synchronous>, transform_indices = @transform_1, window_bounds = array<i64: 128, 128>}, {pipeline_mode = #tpu.pipeline_mode<synchronous>, transform_indices = @transform_2, window_bounds = array<i64: 128, 128>}, {transform_indices = @transform_3, window_bounds = array<i64: 256, 128>}]} {
    %c0 = arith.constant 0 : index
    %c0_0 = arith.constant 0 : index
    %0 = vector.load %arg1[%c0, %c0_0] : memref<256x1xi32, #tpu.memory_space<vmem>>, vector<256x1xi32>
    %1 = tpu.iota {dimensions = array<i32: 1>} : vector<256x128xi32>
    %2 = vector.broadcast %0 : vector<256x1xi32> to vector<256x128xi32>
    %3 = arith.cmpi eq, %1, %2 : vector<256x128xi32>
    %4 = arith.extui %3 : vector<256x128xi1> to vector<256x128xi32>
    %5 = arith.sitofp %4 : vector<256x128xi32> to vector<256x128xf32>
    %6 = arith.truncf %5 : vector<256x128xf32> to vector<256x128xbf16>
    %c0_1 = arith.constant 0 : index
    %c0_2 = arith.constant 0 : index
    %7 = vector.load %arg2[%c0_1, %c0_2] : memref<128x128xbf16, #tpu.memory_space<vmem>>, vector<128x128xbf16>
    %cst = arith.constant dense<0.000000e+00> : vector<256x128xf32>
    %8 = tpu.matmul %6, %7, %cst {dimension_numbers = #tpu.dot_dimension_numbers<[1], [0], [0], [1], [0, 0, 1, 1], [], []>} : vector<256x128xbf16>, vector<128x128xbf16>, vector<256x128xf32> -> vector<256x128xf32>
    %cst_3 = arith.constant 0.000000e+00 : f32
    %9 = vector.broadcast %cst_3 : f32 to vector<256x128xf32>
    %10 = arith.maximumf %8, %9 : vector<256x128xf32>
    %11 = arith.truncf %10 : vector<256x128xf32> to vector<256x128xbf16>
    %c0_4 = arith.constant 0 : index
    %c0_5 = arith.constant 0 : index
    %12 = vector.load %arg3[%c0_4, %c0_5] : memref<128x128xbf16, #tpu.memory_space<vmem>>, vector<128x128xbf16>
    %cst_6 = arith.constant dense<0.000000e+00> : vector<256x128xf32>
    %13 = tpu.matmul %11, %12, %cst_6 {dimension_numbers = #tpu.dot_dimension_numbers<[1], [0], [0], [1], [0, 0, 1, 1], [], []>} : vector<256x128xbf16>, vector<128x128xbf16>, vector<256x128xf32> -> vector<256x128xf32>
    %14 = tpu.iota {dimensions = array<i32: 1>} : vector<256x128xi32>
    %c64_i32 = arith.constant 64 : i32
    %15 = vector.broadcast %c64_i32 : i32 to vector<256x128xi32>
    %16 = arith.cmpi slt, %14, %15 : vector<256x128xi32>
    %cst_7 = arith.constant -1.000000e+30 : f32
    %17 = vector.broadcast %cst_7 : f32 to vector<256x128xf32>
    %18 = arith.select %16, %13, %17 : vector<256x128xi1>, vector<256x128xf32>
    %cst_8 = arith.constant dense<0xFF800000> : vector<256xf32>
    %19 = vector.multi_reduction <maximumf>, %18, %cst_8 [1] : vector<256x128xf32> to vector<256xf32>
    %20 = vector.shape_cast %19 : vector<256xf32> to vector<256x1xf32>
    %21 = vector.broadcast %20 : vector<256x1xf32> to vector<256x128xf32>
    %22 = arith.subf %18, %21 : vector<256x128xf32>
    %23 = math.exp %22 : vector<256x128xf32>
    %cst_9 = arith.constant dense<0.000000e+00> : vector<256xf32>
    %24 = vector.multi_reduction <add>, %23, %cst_9 [1] : vector<256x128xf32> to vector<256xf32>
    %25 = vector.shape_cast %24 : vector<256xf32> to vector<256x1xf32>
    %26 = math.log %25 : vector<256x1xf32>
    %27 = vector.broadcast %26 : vector<256x1xf32> to vector<256x128xf32>
    %28 = arith.subf %22, %27 : vector<256x128xf32>
    %c0_10 = arith.constant 0 : index
    %c0_11 = arith.constant 0 : index
    %29 = vector.load %arg4[%c0_10, %c0_11] : memref<256x128xf32, #tpu.memory_space<vmem>>, vector<256x128xf32>
    tpu.vector_store %arg4[%c0_10, %c0_11], %28 {strides = array<i32>} : memref<256x128xf32, #tpu.memory_space<vmem>>, vector<256x128xf32>,
    return
  }
  func.func @transform_0(%arg0: i32) -> (i32, i32) {
    %c0_i32 = arith.constant 0 : i32
    %c0_i32_0 = arith.constant 0 : i32
    return %arg0, %c0_i32 : i32, i32
  }
  func.func @transform_1(%arg0: i32) -> (i32, i32) {
    %c0_i32 = arith.constant 0 : i32
    %c0_i32_0 = arith.constant 0 : i32
    %c0_i32_1 = arith.constant 0 : i32
    return %c0_i32, %c0_i32_0 : i32, i32
  }
  func.func @transform_2(%arg0: i32) -> (i32, i32) {
    %c0_i32 = arith.constant 0 : i32
    %c0_i32_0 = arith.constant 0 : i32
    %c0_i32_1 = arith.constant 0 : i32
    return %c0_i32, %c0_i32_0 : i32, i32
  }
  func.func @transform_3(%arg0: i32) -> (i32, i32) {
    %c0_i32 = arith.constant 0 : i32
    %c0_i32_0 = arith.constant 0 : i32
    return %arg0, %c0_i32 : i32, i32
  }
}

</mosaic_0001>

<llo_original>
// kernel: skipgram_forward_padded.1
$region0: #{skipgram_forward_padded.1}
  #allocation0 [shape = 'u32[]', space=smem, size = 0x4, offset = 0x4, fixed_abs, tag = 'smem constant byte address 0x4 - core index']
  #allocation1 [shape = 'u32[144,128]{1,0:T(1,128)}', space=vmem, size = 0x12000, scoped, tag = 'internal scratch']
  %s0 = inlined_call_operand.vmem [shape: s32[512,1], index: 0, kind: input, shape index: {}]
  %s1 = inlined_call_operand.vmem [shape: bf16[128,128], index: 1, kind: input, shape index: {}]
  %s2 = inlined_call_operand.vmem [shape: bf16[128,128], index: 2, kind: input, shape index: {}]
  %s3 = inlined_call_operand.hbm [shape: f32[512,128], index: 3, kind: output, shape index: {}]
  %s4 = sld [smem:[#allocation0]]
  $region45: #{skipgram_forward_padded.1} parent=0
    _
  %s6 = ssub.s32 1, %s4
  %s7 = scalar_select 0, %s6, %s4
  $region1: #{skipgram_forward_padded.1} parent=0
    #allocation2 [shape = 'u8[262144]{0}', space=vmem, size = 0x40000, scoped, tag = 'output window, operand 0']
    #allocation3 [shape = 's32[2]{0}', space=sflag, size = 0x8, scoped, tag = 'scoped memory for skipgram_forward_padded.1']
    %8 = vsyncpa [#allocation3], 0
    %s9 = scalar_lea.sflag [#allocation3], 1
    %10 = vsyncpa %s9, 0
    loop: start=0, step=1, limit=4
    $region2: #{skipgram_forward_padded.1} parent=1 // loop_pre_header
      _
    $region3: #{skipgram_forward_padded.1} parent=1 // loop_header
      %s12 = sphi 0, %s16
      %p13 = scmp.ge.s32.totalorder %s12, 4
      %s22 = sphi 0, %s24
      %s25 = sphi 0, %s22
      %s26 = sphi 0, %s25
      %s42 = sphi 0, %s26
      %s46 = sphi 0, %s46
      %s48 = sphi 0, %s46
      %s49 = sphi 0, %s48
      %s63 = sphi 0, %s49
      %s67 = sphi 0, %s67
      %s69 = sphi 0, %s67
      %s70 = sphi 0, %s69
      %s84 = sphi 0, %s70
      %s90 = sphi 0, %s92
      %s93 = sphi 0, %s90
      %s94 = sphi 0, %s93
      %s110 = sphi 0, %s94
    $region4: #{skipgram_forward_padded.1} parent=1 // loop_header_branch
      %15 = sbr.rel (%p13) target = $region8
    $region5: #{skipgram_forward_padded.1} parent=1 // loop_body
      %s17 = ssub.s32 %s12, 1
      %s18 = ssub.s32 %s12, 2
      %s19 = sadd.s32 %s12, 1
      %s20 = ssub.s32 %s12, %s19
      %p21 = scmp.eq.s32.totalorder %s20, 0
      %s23 = sadd.s32 %s22, 1
      %s24 = scalar_select %p21, %s22, %s23
      %p27 = pneg %p21
      %p28 = scmp.eq.s32.totalorder %s12, 1
      %p29 = por %p27, %p28
      %p30 = scmp.ne.s32.totalorder %s22, %s25
      %p31 = scmp.eq.s32.totalorder %s12, 0
      %p32 = por %p30, %p31
      %p33 = scmp.ne.s32.totalorder %s22, %s25
      %p34 = scmp.eq.s32.totalorder %s17, 1
      %p35 = por %p33, %p34
      %p36 = scmp.ne.s32.totalorder %s25, %s26
      %p37 = scmp.eq.s32.totalorder %s17, 0
      %p38 = por %p36, %p37
      %p39 = scmp.ne.s32.totalorder %s25, %s26
      %p40 = scmp.eq.s32.totalorder %s18, 1
      %p41 = por %p39, %p40
      %p43 = scmp.ne.s32.totalorder %s26, %s42
      %p44 = scmp.eq.s32.totalorder %s18, 0
      %p45 = por %p43, %p44
      %s47 = sadd.s32 %s46, 1
      %p50 = scmp.eq.s32.totalorder %s12, 1
      %p51 = scmp.ne.s32.totalorder %s46, %s48
      %p52 = scmp.eq.s32.totalorder %s12, 0
      %p53 = por %p51, %p52
      %p54 = scmp.ne.s32.totalorder %s46, %s48
      %p55 = scmp.eq.s32.totalorder %s17, 1
      %p56 = por %p54, %p55
      %p57 = scmp.ne.s32.totalorder %s48, %s49
      %p58 = scmp.eq.s32.totalorder %s17, 0
      %p59 = por %p57, %p58
      %p60 = scmp.ne.s32.totalorder %s48, %s49
      %p61 = scmp.eq.s32.totalorder %s18, 1
      %p62 = por %p60, %p61
      %p64 = scmp.ne.s32.totalorder %s49, %s63
      %p65 = scmp.eq.s32.totalorder %s18, 0
      %p66 = por %p64, %p65
      %s68 = sadd.s32 %s67, 1
      %p71 = scmp.eq.s32.totalorder %s12, 1
      %p72 = scmp.ne.s32.totalorder %s67, %s69
      %p73 = scmp.eq.s32.totalorder %s12, 0
      %p74 = por %p72, %p73
      %p75 = scmp.ne.s32.totalorder %s67, %s69
      %p76 = scmp.eq.s32.totalorder %s17, 1
      %p77 = por %p75, %p76
      %p78 = scmp.ne.s32.totalorder %s69, %s70
      %p79 = scmp.eq.s32.totalorder %s17, 0
      %p80 = por %p78, %p79
      %p81 = scmp.ne.s32.totalorder %s69, %s70
      %p82 = scmp.eq.s32.totalorder %s18, 1
      %p83 = por %p81, %p82
      %p85 = scmp.ne.s32.totalorder %s70, %s84
      %p86 = scmp.eq.s32.totalorder %s18, 0
      %p87 = por %p85, %p86
      %s88 = ssub.s32 %s12, %s19
      %p89 = scmp.eq.s32.totalorder %s88, 0
      %s91 = sadd.s32 %s90, 1
      %s92 = scalar_select %p89, %s90, %s91
      %p95 = pneg %p89
      %p96 = scmp.eq.s32.totalorder %s12, 1
      %p97 = por %p95, %p96
      %p98 = scmp.ne.s32.totalorder %s90, %s93
      %p99 = scmp.eq.s32.totalorder %s12, 0
      %p100 = por %p98, %p99
      %p101 = scmp.ne.s32.totalorder %s90, %s93
      %p102 = scmp.eq.s32.totalorder %s17, 1
      %p103 = por %p101, %p102
      %p104 = scmp.ne.s32.totalorder %s93, %s94
      %p105 = scmp.eq.s32.totalorder %s17, 0
      %p106 = por %p104, %p105
      %p107 = scmp.ne.s32.totalorder %s93, %s94
      %p108 = scmp.eq.s32.totalorder %s18, 1
      %p109 = por %p107, %p108
      %p111 = scmp.ne.s32.totalorder %s94, %s110
      %p112 = scmp.eq.s32.totalorder %s18, 0
      %p113 = por %p111, %p112
      %p114 = scmp.le.s32.totalorder 1, %s12
      %p115 = scmp.lt.s32.totalorder %s12, 3
      %p116 = pnand %p114, %p115
      %p117 = pneg %p116
      // Predicated region
      $region9: #{skipgram_forward_padded.1} parent=5 // pred_check
        _
      $region10: #{skipgram_forward_padded.1} parent=5 // pred_check_branch
        %119 = sbr.rel (%p116) target = $region12
      $region11: #{skipgram_forward_padded.1} parent=5 // pred_region
        %s120 = ssub.s32 %s12, 1
        // Predicated region
        $region13: #{skipgram_forward_padded.1} parent=11 // pred_check
          %p121 = pneg %p59
        $region14: #{skipgram_forward_padded.1} parent=11 // pred_check_branch
          %123 = sbr.rel (%p121) target = $region16
        $region15: #{skipgram_forward_padded.1} parent=11 // pred_region
          _
        $region16: #{skipgram_forward_padded.1} parent=11 // pred_fallthru
          _
        // Predicated region
        $region17: #{skipgram_forward_padded.1} parent=11 // pred_check
          %p124 = pneg %p80
        $region18: #{skipgram_forward_padded.1} parent=11 // pred_check_branch
          %126 = sbr.rel (%p124) target = $region20
        $region19: #{skipgram_forward_padded.1} parent=11 // pred_region
          _
        $region20: #{skipgram_forward_padded.1} parent=11 // pred_fallthru
          _
      $region12: #{skipgram_forward_padded.1} parent=5 // pred_fallthru
        _
      %p127 = scmp.lt.s32.totalorder %s12, 2
      // Predicated region
      $region21: #{skipgram_forward_padded.1} parent=5 // pred_check
        %p128 = pneg %p127
      $region22: #{skipgram_forward_padded.1} parent=5 // pred_check_branch
        %130 = sbr.rel (%p128) target = $region24
      $region23: #{skipgram_forward_padded.1} parent=5 // pred_region
        // Predicated region
        $region25: #{skipgram_forward_padded.1} parent=23 // pred_check
          %p131 = pneg %p32
        $region26: #{skipgram_forward_padded.1} parent=23 // pred_check_branch
          %133 = sbr.rel (%p131) target = $region28
        $region27: #{skipgram_forward_padded.1} parent=23 // pred_region
          %s134 = smul.u32 32, %s12
          %p135 = scmp.lt.s32.totalorder %s134, 63
          %s136 = scalar_select %p135, %s134, 63
          %s137 = smul.addr %s136, 8
          %s138 = scalar_lea.vmem %s0, %s137
          %s139 = smul.u32 32, %s12
        $region28: #{skipgram_forward_padded.1} parent=23 // pred_fallthru
          _
      $region24: #{skipgram_forward_padded.1} parent=5 // pred_fallthru
        _
      %p140 = scmp.le.s32.totalorder 1, %s12
      %p141 = scmp.lt.s32.totalorder %s12, 3
      %p142 = pnand %p140, %p141
      %p143 = pneg %p142
      // Predicated region
      $region29: #{skipgram_forward_padded.1} parent=5 // pred_check
        _
      $region30: #{skipgram_forward_padded.1} parent=5 // pred_check_branch
        %145 = sbr.rel (%p142) target = $region32
      $region31: #{skipgram_forward_padded.1} parent=5 // pred_region
        %s146 = ssub.s32 %s12, 1
        %s147 = smul.u32 32, %s17
        %p148 = scmp.lt.s32.totalorder %s147, 63
        %s149 = scalar_select %p148, %s147, 63
        %s150 = smul.addr %s149, 8
        %s151 = scalar_lea.vmem %s0, %s150
        %p152 = pneg %p38
        %p153 = pneg %p35
        %p154 = pneg %p59
        %p155 = pneg %p56
        %p156 = pneg %p80
        %p157 = pneg %p77
        %p158 = pneg %p106
        %p159 = pneg %p103
        %s160 = sand.u32 %s93, 1
        %s161 = scalar_lea.sflag [#allocation3], %s160
        %s162 = sand.u32 %s93, 1
        %s163 = smul.addr %s162, 256
        %s164 = scalar_lea.vmem [#allocation2], %s163
        %s165 = smul.u32 32, %s17
        %p166 = scmp.lt.s32.totalorder %s165, 63
        %s167 = scalar_select %p166, %s165, 63
        %s168 = smul.addr %s167, 8
        %s169 = scalar_lea.vmem %s0, %s168
        %s170 = smul.u32 32, %s17
        %s171 = smul.u32 32, %s17
        %v173 = vld [vmem:[%s169] sm:$0xff]
        %v174 = vld [vmem:[%s169 + $0x8] sm:$0xff]
        %v175 = vld [vmem:[%s169 + $0x10] sm:$0xff]
        %v176 = vld [vmem:[%s169 + $0x18] sm:$0xff]
        %v177 = vld [vmem:[%s169 + $0x20] sm:$0xff]
        %v178 = vld [vmem:[%s169 + $0x28] sm:$0xff]
        %v179 = vld [vmem:[%s169 + $0x30] sm:$0xff]
        %v180 = vld [vmem:[%s169 + $0x38] sm:$0xff]
        %v181 = vld [vmem:[%s169 + $0x40] sm:$0xff]
        %v182 = vld [vmem:[%s169 + $0x48] sm:$0xff]
        %v183 = vld [vmem:[%s169 + $0x50] sm:$0xff]
        %v184 = vld [vmem:[%s169 + $0x58] sm:$0xff]
        %v185 = vld [vmem:[%s169 + $0x60] sm:$0xff]
        %v186 = vld [vmem:[%s169 + $0x68] sm:$0xff]
        %v187 = vld [vmem:[%s169 + $0x70] sm:$0xff]
        %v188 = vld [vmem:[%s169 + $0x78] sm:$0xff]
        %v189 = vld [vmem:[%s169 + $0x80] sm:$0xff]
        %v190 = vld [vmem:[%s169 + $0x88] sm:$0xff]
        %v191 = vld [vmem:[%s169 + $0x90] sm:$0xff]
        %v192 = vld [vmem:[%s169 + $0x98] sm:$0xff]
        %v193 = vld [vmem:[%s169 + $0xa0] sm:$0xff]
        %v194 = vld [vmem:[%s169 + $0xa8] sm:$0xff]
        %v195 = vld [vmem:[%s169 + $0xb0] sm:$0xff]
        %v196 = vld [vmem:[%s169 + $0xb8] sm:$0xff]
        %v197 = vld [vmem:[%s169 + $0xc0] sm:$0xff]
        %v198 = vld [vmem:[%s169 + $0xc8] sm:$0xff]
        %v199 = vld [vmem:[%s169 + $0xd0] sm:$0xff]
        %v200 = vld [vmem:[%s169 + $0xd8] sm:$0xff]
        %v201 = vld [vmem:[%s169 + $0xe0] sm:$0xff]
        %v202 = vld [vmem:[%s169 + $0xe8] sm:$0xff]
        %v203 = vld [vmem:[%s169 + $0xf0] sm:$0xff]
        %v204 = vld [vmem:[%s169 + $0xf8] sm:$0xff]
        %v205 = vlaneseq
        %v206 = vand.u32 %v205, 127
        %207 = vset.pattern.permute.xlu0 0
        %208 = vperm.xlu0 %207, %v173
        %v209 = vpop.permute.xlu0 %208
        %210 = vset.pattern.permute.xlu0 0
        %211 = vperm.xlu0 %210, %v174
        %v212 = vpop.permute.xlu0 %211
        %213 = vset.pattern.permute.xlu0 0
        %214 = vperm.xlu0 %213, %v175
        %v215 = vpop.permute.xlu0 %214
        %216 = vset.pattern.permute.xlu0 0
        %217 = vperm.xlu0 %216, %v176
        %v218 = vpop.permute.xlu0 %217
        %219 = vset.pattern.permute.xlu0 0
        %220 = vperm.xlu0 %219, %v177
        %v221 = vpop.permute.xlu0 %220
        %222 = vset.pattern.permute.xlu0 0
        %223 = vperm.xlu0 %222, %v178
        %v224 = vpop.permute.xlu0 %223
        %225 = vset.pattern.permute.xlu0 0
        %226 = vperm.xlu0 %225, %v179
        %v227 = vpop.permute.xlu0 %226
        %228 = vset.pattern.permute.xlu0 0
        %229 = vperm.xlu0 %228, %v180
        %v230 = vpop.permute.xlu0 %229
        %231 = vset.pattern.permute.xlu0 0
        %232 = vperm.xlu0 %231, %v181
        %v233 = vpop.permute.xlu0 %232
        %234 = vset.pattern.permute.xlu0 0
        %235 = vperm.xlu0 %234, %v182
        %v236 = vpop.permute.xlu0 %235
        %237 = vset.pattern.permute.xlu0 0
        %238 = vperm.xlu0 %237, %v183
        %v239 = vpop.permute.xlu0 %238
        %240 = vset.pattern.permute.xlu0 0
        %241 = vperm.xlu0 %240, %v184
        %v242 = vpop.permute.xlu0 %241
        %243 = vset.pattern.permute.xlu0 0
        %244 = vperm.xlu0 %243, %v185
        %v245 = vpop.permute.xlu0 %244
        %246 = vset.pattern.permute.xlu0 0
        %247 = vperm.xlu0 %246, %v186
        %v248 = vpop.permute.xlu0 %247
        %249 = vset.pattern.permute.xlu0 0
        %250 = vperm.xlu0 %249, %v187
        %v251 = vpop.permute.xlu0 %250
        %252 = vset.pattern.permute.xlu0 0
        %253 = vperm.xlu0 %252, %v188
        %v254 = vpop.permute.xlu0 %253
        %255 = vset.pattern.permute.xlu0 0
        %256 = vperm.xlu0 %255, %v189
        %v257 = vpop.permute.xlu0 %256
        %258 = vset.pattern.permute.xlu0 0
        %259 = vperm.xlu0 %258, %v190
        %v260 = vpop.permute.xlu0 %259
        %261 = vset.pattern.permute.xlu0 0
        %262 = vperm.xlu0 %261, %v191
        %v263 = vpop.permute.xlu0 %262
        %264 = vset.pattern.permute.xlu0 0
        %265 = vperm.xlu0 %264, %v192
        %v266 = vpop.permute.xlu0 %265
        %267 = vset.pattern.permute.xlu0 0
        %268 = vperm.xlu0 %267, %v193
        %v269 = vpop.permute.xlu0 %268
        %270 = vset.pattern.permute.xlu0 0
        %271 = vperm.xlu0 %270, %v194
        %v272 = vpop.permute.xlu0 %271
        %273 = vset.pattern.permute.xlu0 0
        %274 = vperm.xlu0 %273, %v195
        %v275 = vpop.permute.xlu0 %274
        %276 = vset.pattern.permute.xlu0 0
        %277 = vperm.xlu0 %276, %v196
        %v278 = vpop.permute.xlu0 %277
        %279 = vset.pattern.permute.xlu0 0
        %280 = vperm.xlu0 %279, %v197
        %v281 = vpop.permute.xlu0 %280
        %282 = vset.pattern.permute.xlu0 0
        %283 = vperm.xlu0 %282, %v198
        %v284 = vpop.permute.xlu0 %283
        %285 = vset.pattern.permute.xlu0 0
        %286 = vperm.xlu0 %285, %v199
        %v287 = vpop.permute.xlu0 %286
        %288 = vset.pattern.permute.xlu0 0
        %289 = vperm.xlu0 %288, %v200
        %v290 = vpop.permute.xlu0 %289
        %291 = vset.pattern.permute.xlu0 0
        %292 = vperm.xlu0 %291, %v201
        %v293 = vpop.permute.xlu0 %292
        %294 = vset.pattern.permute.xlu0 0
        %295 = vperm.xlu0 %294, %v202
        %v296 = vpop.permute.xlu0 %295
        %297 = vset.pattern.permute.xlu0 0
        %298 = vperm.xlu0 %297, %v203
        %v299 = vpop.permute.xlu0 %298
        %300 = vset.pattern.permute.xlu0 0
        %301 = vperm.xlu0 %300, %v204
        %v302 = vpop.permute.xlu0 %301
        %vm303 = vcmp.eq.s32.totalorder %v206, %v209
        %vm304 = vcmp.eq.s32.totalorder %v206, %v212
        %vm305 = vcmp.eq.s32.totalorder %v206, %v215
        %vm306 = vcmp.eq.s32.totalorder %v206, %v218
        %vm307 = vcmp.eq.s32.totalorder %v206, %v221
        %vm308 = vcmp.eq.s32.totalorder %v206, %v224
        %vm309 = vcmp.eq.s32.totalorder %v206, %v227
        %vm310 = vcmp.eq.s32.totalorder %v206, %v230
        %vm311 = vcmp.eq.s32.totalorder %v206, %v233
        %vm312 = vcmp.eq.s32.totalorder %v206, %v236
        %vm313 = vcmp.eq.s32.totalorder %v206, %v239
        %vm314 = vcmp.eq.s32.totalorder %v206, %v242
        %vm315 = vcmp.eq.s32.totalorder %v206, %v245
        %vm316 = vcmp.eq.s32.totalorder %v206, %v248
        %vm317 = vcmp.eq.s32.totalorder %v206, %v251
        %vm318 = vcmp.eq.s32.totalorder %v206, %v254
        %vm319 = vcmp.eq.s32.totalorder %v206, %v257
        %vm320 = vcmp.eq.s32.totalorder %v206, %v260
        %vm321 = vcmp.eq.s32.totalorder %v206, %v263
        %vm322 = vcmp.eq.s32.totalorder %v206, %v266
        %vm323 = vcmp.eq.s32.totalorder %v206, %v269
        %vm324 = vcmp.eq.s32.totalorder %v206, %v272
        %vm325 = vcmp.eq.s32.totalorder %v206, %v275
        %vm326 = vcmp.eq.s32.totalorder %v206, %v278
        %vm327 = vcmp.eq.s32.totalorder %v206, %v281
        %vm328 = vcmp.eq.s32.totalorder %v206, %v284
        %vm329 = vcmp.eq.s32.totalorder %v206, %v287
        %vm330 = vcmp.eq.s32.totalorder %v206, %v290
        %vm331 = vcmp.eq.s32.totalorder %v206, %v293
        %vm332 = vcmp.eq.s32.totalorder %v206, %v296
        %vm333 = vcmp.eq.s32.totalorder %v206, %v299
        %vm334 = vcmp.eq.s32.totalorder %v206, %v302
        %v335 = vsel %vm303, 1, 0
        %v336 = vsel %vm304, 1, 0
        %v337 = vsel %vm305, 1, 0
        %v338 = vsel %vm306, 1, 0
        %v339 = vsel %vm307, 1, 0
        %v340 = vsel %vm308, 1, 0
        %v341 = vsel %vm309, 1, 0
        %v342 = vsel %vm310, 1, 0
        %v343 = vsel %vm311, 1, 0
        %v344 = vsel %vm312, 1, 0
        %v345 = vsel %vm313, 1, 0
        %v346 = vsel %vm314, 1, 0
        %v347 = vsel %vm315, 1, 0
        %v348 = vsel %vm316, 1, 0
        %v349 = vsel %vm317, 1, 0
        %v350 = vsel %vm318, 1, 0
        %v351 = vsel %vm319, 1, 0
        %v352 = vsel %vm320, 1, 0
        %v353 = vsel %vm321, 1, 0
        %v354 = vsel %vm322, 1, 0
        %v355 = vsel %vm323, 1, 0
        %v356 = vsel %vm324, 1, 0
        %v357 = vsel %vm325, 1, 0
        %v358 = vsel %vm326, 1, 0
        %v359 = vsel %vm327, 1, 0
        %v360 = vsel %vm328, 1, 0
        %v361 = vsel %vm329, 1, 0
        %v362 = vsel %vm330, 1, 0
        %v363 = vsel %vm331, 1, 0
        %v364 = vsel %vm332, 1, 0
        %v365 = vsel %vm333, 1, 0
        %v366 = vsel %vm334, 1, 0
        %v367 = vcvt.s32.f32 %v335
        %v368 = vcvt.s32.f32 %v336
        %v369 = vcvt.s32.f32 %v337
        %v370 = vcvt.s32.f32 %v338
        %v371 = vcvt.s32.f32 %v339
        %v372 = vcvt.s32.f32 %v340
        %v373 = vcvt.s32.f32 %v341
        %v374 = vcvt.s32.f32 %v342
        %v375 = vcvt.s32.f32 %v343
        %v376 = vcvt.s32.f32 %v344
        %v377 = vcvt.s32.f32 %v345
        %v378 = vcvt.s32.f32 %v346
        %v379 = vcvt.s32.f32 %v347
        %v380 = vcvt.s32.f32 %v348
        %v381 = vcvt.s32.f32 %v349
        %v382 = vcvt.s32.f32 %v350
        %v383 = vcvt.s32.f32 %v351
        %v384 = vcvt.s32.f32 %v352
        %v385 = vcvt.s32.f32 %v353
        %v386 = vcvt.s32.f32 %v354
        %v387 = vcvt.s32.f32 %v355
        %v388 = vcvt.s32.f32 %v356
        %v389 = vcvt.s32.f32 %v357
        %v390 = vcvt.s32.f32 %v358
        %v391 = vcvt.s32.f32 %v359
        %v392 = vcvt.s32.f32 %v360
        %v393 = vcvt.s32.f32 %v361
        %v394 = vcvt.s32.f32 %v362
        %v395 = vcvt.s32.f32 %v363
        %v396 = vcvt.s32.f32 %v364
        %v397 = vcvt.s32.f32 %v365
        %v398 = vcvt.s32.f32 %v366
        %v399 = vpack.c.bf16 %v368, %v367
        %v400 = vpack.c.bf16 %v370, %v369
        %v401 = vpack.c.bf16 %v372, %v371
        %v402 = vpack.c.bf16 %v374, %v373
        %v403 = vpack.c.bf16 %v376, %v375
        %v404 = vpack.c.bf16 %v378, %v377
        %v405 = vpack.c.bf16 %v380, %v379
        %v406 = vpack.c.bf16 %v382, %v381
        %v407 = vpack.c.bf16 %v384, %v383
        %v408 = vpack.c.bf16 %v386, %v385
        %v409 = vpack.c.bf16 %v388, %v387
        %v410 = vpack.c.bf16 %v390, %v389
        %v411 = vpack.c.bf16 %v392, %v391
        %v412 = vpack.c.bf16 %v394, %v393
        %v413 = vpack.c.bf16 %v396, %v395
        %v414 = vpack.c.bf16 %v398, %v397
        %v415 = vld [vmem:[%s1] sm:$0xf]
        %v416 = vld [vmem:[%s1 + $0x4] sm:$0xf]
        %v417 = vld [vmem:[%s1 + $0x8] sm:$0xf]
        %v418 = vld [vmem:[%s1 + $0xc] sm:$0xf]
        %v419 = vld [vmem:[%s1 + $0x10] sm:$0xf]
        %v420 = vld [vmem:[%s1 + $0x14] sm:$0xf]
        %v421 = vld [vmem:[%s1 + $0x18] sm:$0xf]
        %v422 = vld [vmem:[%s1 + $0x1c] sm:$0xf]
        %v423 = vld [vmem:[%s1 + $0x20] sm:$0xf]
        %v424 = vld [vmem:[%s1 + $0x24] sm:$0xf]
        %v425 = vld [vmem:[%s1 + $0x28] sm:$0xf]
        %v426 = vld [vmem:[%s1 + $0x2c] sm:$0xf]
        %v427 = vld [vmem:[%s1 + $0x30] sm:$0xf]
        %v428 = vld [vmem:[%s1 + $0x34] sm:$0xf]
        %v429 = vld [vmem:[%s1 + $0x38] sm:$0xf]
        %v430 = vld [vmem:[%s1 + $0x3c] sm:$0xf]
        %v447 = vunpack.c.l.b16 %v415
        %v448 = vunpack.c.l.b16 %v416
        %v449 = vunpack.c.l.b16 %v417
        %v450 = vunpack.c.l.b16 %v418
        %v451 = vunpack.c.l.b16 %v419
        %v452 = vunpack.c.l.b16 %v420
        %v453 = vunpack.c.l.b16 %v421
        %v454 = vunpack.c.l.b16 %v422
        %v455 = vunpack.c.l.b16 %v423
        %v456 = vunpack.c.l.b16 %v424
        %v457 = vunpack.c.l.b16 %v425
        %v458 = vunpack.c.l.b16 %v426
        %v459 = vunpack.c.l.b16 %v427
        %v460 = vunpack.c.l.b16 %v428
        %v461 = vunpack.c.l.b16 %v429
        %v462 = vunpack.c.l.b16 %v430
        %v463 = vpack.c.b16 %v448, %v447
        %v464 = vpack.c.b16 %v450, %v449
        %v465 = vpack.c.b16 %v452, %v451
        %v466 = vpack.c.b16 %v454, %v453
        %v467 = vpack.c.b16 %v456, %v455
        %v468 = vpack.c.b16 %v458, %v457
        %v469 = vpack.c.b16 %v460, %v459
        %v470 = vpack.c.b16 %v462, %v461
        %479 = vmatprep.subr.bf16.mxu0 0
        %480 = vmatpush1.bf16.msra.mxu0 %v470
        %481 = vmatprep.subr.bf16.mxu0 0
        %482 = vmatpush1.bf16.msra.mxu0 %v469
        %483 = vmatprep.subr.bf16.mxu0 0
        %484 = vmatpush1.bf16.msra.mxu0 %v468
        %485 = vmatprep.subr.bf16.mxu0 0
        %486 = vmatpush1.bf16.msra.mxu0 %v467
        %487 = vmatprep.subr.bf16.mxu0 0
        %488 = vmatpush1.bf16.msra.mxu0 %v466
        %489 = vmatprep.subr.bf16.mxu0 0
        %490 = vmatpush1.bf16.msra.mxu0 %v465
        %491 = vmatprep.subr.bf16.mxu0 0
        %492 = vmatpush1.bf16.msra.mxu0 %v464
        %493 = vmatprep.subr.bf16.mxu0 0
        %494 = vmatpush1.bf16.msra.mxu0 %v463
        %495 = vmatprep.subr.bf16.mxu0 0
        %496 = vmatpush2.bf16.msra.mxu0 0
        %497 = vmatprep.subr.bf16.mxu0 0
        %498 = vmatpush2.bf16.msra.mxu0 0
        %499 = vmatprep.subr.bf16.mxu0 0
        %500 = vmatpush2.bf16.msra.mxu0 0
        %501 = vmatprep.subr.bf16.mxu0 0
        %502 = vmatpush2.bf16.msra.mxu0 0
        %503 = vmatprep.subr.bf16.mxu0 0
        %504 = vmatpush2.bf16.msra.mxu0 0
        %505 = vmatprep.subr.bf16.mxu0 0
        %506 = vmatpush2.bf16.msra.mxu0 0
        %507 = vmatprep.subr.bf16.mxu0 0
        %508 = vmatpush2.bf16.msra.mxu0 0
        %509 = vmatprep.subr.bf16.mxu0 0
        %510 = vmatpush2.bf16.msra.mxu0 0
        %511 = vmatprep.mubr.bf16.mxu0 0
        %512 = vmatmul.mubr.bf16.gmra.mxu0 %v399
        %v513 = vpop.f32.mrf.mxu0
        %v514 = vadd.f32 0.0, %v513
        %v515 = vpop.f32.mrf.mxu0
        %v516 = vpop.f32.mrf.mxu0
        %v517 = vadd.f32 0.0, %v516
        %v518 = vpop.f32.mrf.mxu0
        %519 = vmatprep.mubr.bf16.mxu0 0
        %520 = vmatmul.mubr.bf16.gmra.mxu0 %v400
        %v521 = vpop.f32.mrf.mxu0
        %v522 = vadd.f32 0.0, %v521
        %v523 = vpop.f32.mrf.mxu0
        %v524 = vpop.f32.mrf.mxu0
        %v525 = vadd.f32 0.0, %v524
        %v526 = vpop.f32.mrf.mxu0
        %527 = vmatprep.mubr.bf16.mxu0 0
        %528 = vmatmul.mubr.bf16.gmra.mxu0 %v401
        %v529 = vpop.f32.mrf.mxu0
        %v530 = vadd.f32 0.0, %v529
        %v531 = vpop.f32.mrf.mxu0
        %v532 = vpop.f32.mrf.mxu0
        %v533 = vadd.f32 0.0, %v532
        %v534 = vpop.f32.mrf.mxu0
        %535 = vmatprep.mubr.bf16.mxu0 0
        %536 = vmatmul.mubr.bf16.gmra.mxu0 %v402
        %v537 = vpop.f32.mrf.mxu0
        %v538 = vadd.f32 0.0, %v537
        %v539 = vpop.f32.mrf.mxu0
        %v540 = vpop.f32.mrf.mxu0
        %v541 = vadd.f32 0.0, %v540
        %v542 = vpop.f32.mrf.mxu0
        %543 = vmatprep.mubr.bf16.mxu0 0
        %544 = vmatmul.mubr.bf16.gmra.mxu0 %v403
        %v545 = vpop.f32.mrf.mxu0
        %v546 = vadd.f32 0.0, %v545
        %v547 = vpop.f32.mrf.mxu0
        %v548 = vpop.f32.mrf.mxu0
        %v549 = vadd.f32 0.0, %v548
        %v550 = vpop.f32.mrf.mxu0
        %551 = vmatprep.mubr.bf16.mxu0 0
        %552 = vmatmul.mubr.bf16.gmra.mxu0 %v404
        %v553 = vpop.f32.mrf.mxu0
        %v554 = vadd.f32 0.0, %v553
        %v555 = vpop.f32.mrf.mxu0
        %v556 = vpop.f32.mrf.mxu0
        %v557 = vadd.f32 0.0, %v556
        %v558 = vpop.f32.mrf.mxu0
        %559 = vmatprep.mubr.bf16.mxu0 0
        %560 = vmatmul.mubr.bf16.gmra.mxu0 %v405
        %v561 = vpop.f32.mrf.mxu0
        %v562 = vadd.f32 0.0, %v561
        %v563 = vpop.f32.mrf.mxu0
        %v564 = vpop.f32.mrf.mxu0
        %v565 = vadd.f32 0.0, %v564
        %v566 = vpop.f32.mrf.mxu0
        %567 = vmatprep.mubr.bf16.mxu0 0
        %568 = vmatmul.mubr.bf16.gmra.mxu0 %v406
        %v569 = vpop.f32.mrf.mxu0
        %v570 = vadd.f32 0.0, %v569
        %v571 = vpop.f32.mrf.mxu0
        %v572 = vpop.f32.mrf.mxu0
        %v573 = vadd.f32 0.0, %v572
        %v574 = vpop.f32.mrf.mxu0
        %575 = vmatprep.mubr.bf16.mxu0 0
        %576 = vmatmul.mubr.bf16.gmra.mxu0 %v407
        %v577 = vpop.f32.mrf.mxu0
        %v578 = vadd.f32 0.0, %v577
        %v579 = vpop.f32.mrf.mxu0
        %v580 = vpop.f32.mrf.mxu0
        %v581 = vadd.f32 0.0, %v580
        %v582 = vpop.f32.mrf.mxu0
        %583 = vmatprep.mubr.bf16.mxu0 0
        %584 = vmatmul.mubr.bf16.gmra.mxu0 %v408
        %v585 = vpop.f32.mrf.mxu0
        %v586 = vadd.f32 0.0, %v585
        %v587 = vpop.f32.mrf.mxu0
        %v588 = vpop.f32.mrf.mxu0
        %v589 = vadd.f32 0.0, %v588
        %v590 = vpop.f32.mrf.mxu0
        %591 = vmatprep.mubr.bf16.mxu0 0
        %592 = vmatmul.mubr.bf16.gmra.mxu0 %v409
        %v593 = vpop.f32.mrf.mxu0
        %v594 = vadd.f32 0.0, %v593
        %v595 = vpop.f32.mrf.mxu0
        %v596 = vpop.f32.mrf.mxu0
        %v597 = vadd.f32 0.0, %v596
        %v598 = vpop.f32.mrf.mxu0
        %599 = vmatprep.mubr.bf16.mxu0 0
        %600 = vmatmul.mubr.bf16.gmra.mxu0 %v410
        %v601 = vpop.f32.mrf.mxu0
        %v602 = vadd.f32 0.0, %v601
        %v603 = vpop.f32.mrf.mxu0
        %v604 = vpop.f32.mrf.mxu0
        %v605 = vadd.f32 0.0, %v604
        %v606 = vpop.f32.mrf.mxu0
        %607 = vmatprep.mubr.bf16.mxu0 0
        %608 = vmatmul.mubr.bf16.gmra.mxu0 %v411
        %v609 = vpop.f32.mrf.mxu0
        %v610 = vadd.f32 0.0, %v609
        %v611 = vpop.f32.mrf.mxu0
        %v612 = vpop.f32.mrf.mxu0
        %v613 = vadd.f32 0.0, %v612
        %v614 = vpop.f32.mrf.mxu0
        %615 = vmatprep.mubr.bf16.mxu0 0
        %616 = vmatmul.mubr.bf16.gmra.mxu0 %v412
        %v617 = vpop.f32.mrf.mxu0
        %v618 = vadd.f32 0.0, %v617
        %v619 = vpop.f32.mrf.mxu0
        %v620 = vpop.f32.mrf.mxu0
        %v621 = vadd.f32 0.0, %v620
        %v622 = vpop.f32.mrf.mxu0
        %623 = vmatprep.mubr.bf16.mxu0 0
        %624 = vmatmul.mubr.bf16.gmra.mxu0 %v413
        %v625 = vpop.f32.mrf.mxu0
        %v626 = vadd.f32 0.0, %v625
        %v627 = vpop.f32.mrf.mxu0
        %v628 = vpop.f32.mrf.mxu0
        %v629 = vadd.f32 0.0, %v628
        %v630 = vpop.f32.mrf.mxu0
        %631 = vmatprep.mubr.bf16.mxu0 0
        %632 = vmatmul.mubr.bf16.gmra.mxu0 %v414
        %v633 = vpop.f32.mrf.mxu0
        %v634 = vadd.f32 0.0, %v633
        %v635 = vpop.f32.mrf.mxu0
        %v636 = vpop.f32.mrf.mxu0
        %v637 = vadd.f32 0.0, %v636
        %v638 = vpop.f32.mrf.mxu0
        %639 = vdwg.mxu0
        %v640 = vmax.f32 %v514, 0.0
        %v641 = vmax.f32 %v517, 0.0
        %v642 = vmax.f32 %v522, 0.0
        %v643 = vmax.f32 %v525, 0.0
        %v644 = vmax.f32 %v530, 0.0
        %v645 = vmax.f32 %v533, 0.0
        %v646 = vmax.f32 %v538, 0.0
        %v647 = vmax.f32 %v541, 0.0
        %v648 = vmax.f32 %v546, 0.0
        %v649 = vmax.f32 %v549, 0.0
        %v650 = vmax.f32 %v554, 0.0
        %v651 = vmax.f32 %v557, 0.0
        %v652 = vmax.f32 %v562, 0.0
        %v653 = vmax.f32 %v565, 0.0
        %v654 = vmax.f32 %v570, 0.0
        %v655 = vmax.f32 %v573, 0.0
        %v656 = vmax.f32 %v578, 0.0
        %v657 = vmax.f32 %v581, 0.0
        %v658 = vmax.f32 %v586, 0.0
        %v659 = vmax.f32 %v589, 0.0
        %v660 = vmax.f32 %v594, 0.0
        %v661 = vmax.f32 %v597, 0.0
        %v662 = vmax.f32 %v602, 0.0
        %v663 = vmax.f32 %v605, 0.0
        %v664 = vmax.f32 %v610, 0.0
        %v665 = vmax.f32 %v613, 0.0
        %v666 = vmax.f32 %v618, 0.0
        %v667 = vmax.f32 %v621, 0.0
        %v668 = vmax.f32 %v626, 0.0
        %v669 = vmax.f32 %v629, 0.0
        %v670 = vmax.f32 %v634, 0.0
        %v671 = vmax.f32 %v637, 0.0
        %v672 = vpack.c.bf16 %v641, %v640
        %v673 = vpack.c.bf16 %v643, %v642
        %v674 = vpack.c.bf16 %v645, %v644
        %v675 = vpack.c.bf16 %v647, %v646
        %v676 = vpack.c.bf16 %v649, %v648
        %v677 = vpack.c.bf16 %v651, %v650
        %v678 = vpack.c.bf16 %v653, %v652
        %v679 = vpack.c.bf16 %v655, %v654
        %v680 = vpack.c.bf16 %v657, %v656
        %v681 = vpack.c.bf16 %v659, %v658
        %v682 = vpack.c.bf16 %v661, %v660
        %v683 = vpack.c.bf16 %v663, %v662
        %v684 = vpack.c.bf16 %v665, %v664
        %v685 = vpack.c.bf16 %v667, %v666
        %v686 = vpack.c.bf16 %v669, %v668
        %v687 = vpack.c.bf16 %v671, %v670
        %v688 = vld [vmem:[%s2] sm:$0xf]
        %v689 = vld [vmem:[%s2 + $0x4] sm:$0xf]
        %v690 = vld [vmem:[%s2 + $0x8] sm:$0xf]
        %v691 = vld [vmem:[%s2 + $0xc] sm:$0xf]
        %v692 = vld [vmem:[%s2 + $0x10] sm:$0xf]
        %v693 = vld [vmem:[%s2 + $0x14] sm:$0xf]
        %v694 = vld [vmem:[%s2 + $0x18] sm:$0xf]
        %v695 = vld [vmem:[%s2 + $0x1c] sm:$0xf]
        %v696 = vld [vmem:[%s2 + $0x20] sm:$0xf]
        %v697 = vld [vmem:[%s2 + $0x24] sm:$0xf]
        %v698 = vld [vmem:[%s2 + $0x28] sm:$0xf]
        %v699 = vld [vmem:[%s2 + $0x2c] sm:$0xf]
        %v700 = vld [vmem:[%s2 + $0x30] sm:$0xf]
        %v701 = vld [vmem:[%s2 + $0x34] sm:$0xf]
        %v702 = vld [vmem:[%s2 + $0x38] sm:$0xf]
        %v703 = vld [vmem:[%s2 + $0x3c] sm:$0xf]
        %v720 = vunpack.c.l.b16 %v688
        %v721 = vunpack.c.l.b16 %v689
        %v722 = vunpack.c.l.b16 %v690
        %v723 = vunpack.c.l.b16 %v691
        %v724 = vunpack.c.l.b16 %v692
        %v725 = vunpack.c.l.b16 %v693
        %v726 = vunpack.c.l.b16 %v694
        %v727 = vunpack.c.l.b16 %v695
        %v728 = vunpack.c.l.b16 %v696
        %v729 = vunpack.c.l.b16 %v697
        %v730 = vunpack.c.l.b16 %v698
        %v731 = vunpack.c.l.b16 %v699
        %v732 = vunpack.c.l.b16 %v700
        %v733 = vunpack.c.l.b16 %v701
        %v734 = vunpack.c.l.b16 %v702
        %v735 = vunpack.c.l.b16 %v703
        %v736 = vpack.c.b16 %v721, %v720
        %v737 = vpack.c.b16 %v723, %v722
        %v738 = vpack.c.b16 %v725, %v724
        %v739 = vpack.c.b16 %v727, %v726
        %v740 = vpack.c.b16 %v729, %v728
        %v741 = vpack.c.b16 %v731, %v730
        %v742 = vpack.c.b16 %v733, %v732
        %v743 = vpack.c.b16 %v735, %v734
        %752 = vmatprep.subr.bf16.mxu0 0
        %753 = vmatpush1.bf16.msra.mxu0 %v743
        %754 = vmatprep.subr.bf16.mxu0 0
        %755 = vmatpush1.bf16.msra.mxu0 %v742
        %756 = vmatprep.subr.bf16.mxu0 0
        %757 = vmatpush1.bf16.msra.mxu0 %v741
        %758 = vmatprep.subr.bf16.mxu0 0
        %759 = vmatpush1.bf16.msra.mxu0 %v740
        %760 = vmatprep.subr.bf16.mxu0 0
        %761 = vmatpush1.bf16.msra.mxu0 %v739
        %762 = vmatprep.subr.bf16.mxu0 0
        %763 = vmatpush1.bf16.msra.mxu0 %v738
        %764 = vmatprep.subr.bf16.mxu0 0
        %765 = vmatpush1.bf16.msra.mxu0 %v737
        %766 = vmatprep.subr.bf16.mxu0 0
        %767 = vmatpush1.bf16.msra.mxu0 %v736
        %768 = vmatprep.subr.bf16.mxu0 0
        %769 = vmatpush2.bf16.msra.mxu0 0
        %770 = vmatprep.subr.bf16.mxu0 0
        %771 = vmatpush2.bf16.msra.mxu0 0
        %772 = vmatprep.subr.bf16.mxu0 0
        %773 = vmatpush2.bf16.msra.mxu0 0
        %774 = vmatprep.subr.bf16.mxu0 0
        %775 = vmatpush2.bf16.msra.mxu0 0
        %776 = vmatprep.subr.bf16.mxu0 0
        %777 = vmatpush2.bf16.msra.mxu0 0
        %778 = vmatprep.subr.bf16.mxu0 0
        %779 = vmatpush2.bf16.msra.mxu0 0
        %780 = vmatprep.subr.bf16.mxu0 0
        %781 = vmatpush2.bf16.msra.mxu0 0
        %782 = vmatprep.subr.bf16.mxu0 0
        %783 = vmatpush2.bf16.msra.mxu0 0
        %784 = vmatprep.mubr.bf16.mxu0 0
        %785 = vmatmul.mubr.bf16.gmra.mxu0 %v672
        %v786 = vpop.f32.mrf.mxu0
        %v787 = vadd.f32 0.0, %v786
        %v788 = vpop.f32.mrf.mxu0
        %v789 = vpop.f32.mrf.mxu0
        %v790 = vadd.f32 0.0, %v789
        %v791 = vpop.f32.mrf.mxu0
        %792 = vmatprep.mubr.bf16.mxu0 0
        %793 = vmatmul.mubr.bf16.gmra.mxu0 %v673
        %v794 = vpop.f32.mrf.mxu0
        %v795 = vadd.f32 0.0, %v794
        %v796 = vpop.f32.mrf.mxu0
        %v797 = vpop.f32.mrf.mxu0
        %v798 = vadd.f32 0.0, %v797
        %v799 = vpop.f32.mrf.mxu0
        %800 = vmatprep.mubr.bf16.mxu0 0
        %801 = vmatmul.mubr.bf16.gmra.mxu0 %v674
        %v802 = vpop.f32.mrf.mxu0
        %v803 = vadd.f32 0.0, %v802
        %v804 = vpop.f32.mrf.mxu0
        %v805 = vpop.f32.mrf.mxu0
        %v806 = vadd.f32 0.0, %v805
        %v807 = vpop.f32.mrf.mxu0
        %808 = vmatprep.mubr.bf16.mxu0 0
        %809 = vmatmul.mubr.bf16.gmra.mxu0 %v675
        %v810 = vpop.f32.mrf.mxu0
        %v811 = vadd.f32 0.0, %v810
        %v812 = vpop.f32.mrf.mxu0
        %v813 = vpop.f32.mrf.mxu0
        %v814 = vadd.f32 0.0, %v813
        %v815 = vpop.f32.mrf.mxu0
        %816 = vmatprep.mubr.bf16.mxu0 0
        %817 = vmatmul.mubr.bf16.gmra.mxu0 %v676
        %v818 = vpop.f32.mrf.mxu0
        %v819 = vadd.f32 0.0, %v818
        %v820 = vpop.f32.mrf.mxu0
        %v821 = vpop.f32.mrf.mxu0
        %v822 = vadd.f32 0.0, %v821
        %v823 = vpop.f32.mrf.mxu0
        %824 = vmatprep.mubr.bf16.mxu0 0
        %825 = vmatmul.mubr.bf16.gmra.mxu0 %v677
        %v826 = vpop.f32.mrf.mxu0
        %v827 = vadd.f32 0.0, %v826
        %v828 = vpop.f32.mrf.mxu0
        %v829 = vpop.f32.mrf.mxu0
        %v830 = vadd.f32 0.0, %v829
        %v831 = vpop.f32.mrf.mxu0
        %832 = vmatprep.mubr.bf16.mxu0 0
        %833 = vmatmul.mubr.bf16.gmra.mxu0 %v678
        %v834 = vpop.f32.mrf.mxu0
        %v835 = vadd.f32 0.0, %v834
        %v836 = vpop.f32.mrf.mxu0
        %v837 = vpop.f32.mrf.mxu0
        %v838 = vadd.f32 0.0, %v837
        %v839 = vpop.f32.mrf.mxu0
        %840 = vmatprep.mubr.bf16.mxu0 0
        %841 = vmatmul.mubr.bf16.gmra.mxu0 %v679
        %v842 = vpop.f32.mrf.mxu0
        %v843 = vadd.f32 0.0, %v842
        %v844 = vpop.f32.mrf.mxu0
        %v845 = vpop.f32.mrf.mxu0
        %v846 = vadd.f32 0.0, %v845
        %v847 = vpop.f32.mrf.mxu0
        %848 = vmatprep.mubr.bf16.mxu0 0
        %849 = vmatmul.mubr.bf16.gmra.mxu0 %v680
        %v850 = vpop.f32.mrf.mxu0
        %v851 = vadd.f32 0.0, %v850
        %v852 = vpop.f32.mrf.mxu0
        %v853 = vpop.f32.mrf.mxu0
        %v854 = vadd.f32 0.0, %v853
        %v855 = vpop.f32.mrf.mxu0
        %856 = vmatprep.mubr.bf16.mxu0 0
        %857 = vmatmul.mubr.bf16.gmra.mxu0 %v681
        %v858 = vpop.f32.mrf.mxu0
        %v859 = vadd.f32 0.0, %v858
        %v860 = vpop.f32.mrf.mxu0
        %v861 = vpop.f32.mrf.mxu0
        %v862 = vadd.f32 0.0, %v861
        %v863 = vpop.f32.mrf.mxu0
        %864 = vmatprep.mubr.bf16.mxu0 0
        %865 = vmatmul.mubr.bf16.gmra.mxu0 %v682
        %v866 = vpop.f32.mrf.mxu0
        %v867 = vadd.f32 0.0, %v866
        %v868 = vpop.f32.mrf.mxu0
        %v869 = vpop.f32.mrf.mxu0
        %v870 = vadd.f32 0.0, %v869
        %v871 = vpop.f32.mrf.mxu0
        %872 = vmatprep.mubr.bf16.mxu0 0
        %873 = vmatmul.mubr.bf16.gmra.mxu0 %v683
        %v874 = vpop.f32.mrf.mxu0
        %v875 = vadd.f32 0.0, %v874
        %v876 = vpop.f32.mrf.mxu0
        %v877 = vpop.f32.mrf.mxu0
        %v878 = vadd.f32 0.0, %v877
        %v879 = vpop.f32.mrf.mxu0
        %880 = vmatprep.mubr.bf16.mxu0 0
        %881 = vmatmul.mubr.bf16.gmra.mxu0 %v684
        %v882 = vpop.f32.mrf.mxu0
        %v883 = vadd.f32 0.0, %v882
        %v884 = vpop.f32.mrf.mxu0
        %v885 = vpop.f32.mrf.mxu0
        %v886 = vadd.f32 0.0, %v885
        %v887 = vpop.f32.mrf.mxu0
        %888 = vmatprep.mubr.bf16.mxu0 0
        %889 = vmatmul.mubr.bf16.gmra.mxu0 %v685
        %v890 = vpop.f32.mrf.mxu0
        %v891 = vadd.f32 0.0, %v890
        %v892 = vpop.f32.mrf.mxu0
        %v893 = vpop.f32.mrf.mxu0
        %v894 = vadd.f32 0.0, %v893
        %v895 = vpop.f32.mrf.mxu0
        %896 = vmatprep.mubr.bf16.mxu0 0
        %897 = vmatmul.mubr.bf16.gmra.mxu0 %v686
        %v898 = vpop.f32.mrf.mxu0
        %v899 = vadd.f32 0.0, %v898
        %v900 = vpop.f32.mrf.mxu0
        %v901 = vpop.f32.mrf.mxu0
        %v902 = vadd.f32 0.0, %v901
        %v903 = vpop.f32.mrf.mxu0
        %904 = vmatprep.mubr.bf16.mxu0 0
        %905 = vmatmul.mubr.bf16.gmra.mxu0 %v687
        %v906 = vpop.f32.mrf.mxu0
        %v907 = vadd.f32 0.0, %v906
        %v908 = vpop.f32.mrf.mxu0
        %v909 = vpop.f32.mrf.mxu0
        %v910 = vadd.f32 0.0, %v909
        %v911 = vpop.f32.mrf.mxu0
        %912 = vdwg.mxu0
        %vm913 = vcmp.lt.s32.totalorder %v206, 64
        %v914 = vsel %vm913, %v787, -1e+30
        %v915 = vsel %vm913, %v790, -1e+30
        %v916 = vsel %vm913, %v795, -1e+30
        %v917 = vsel %vm913, %v798, -1e+30
        %v918 = vsel %vm913, %v803, -1e+30
        %v919 = vsel %vm913, %v806, -1e+30
        %v920 = vsel %vm913, %v811, -1e+30
        %v921 = vsel %vm913, %v814, -1e+30
        %v922 = vsel %vm913, %v819, -1e+30
        %v923 = vsel %vm913, %v822, -1e+30
        %v924 = vsel %vm913, %v827, -1e+30
        %v925 = vsel %vm913, %v830, -1e+30
        %v926 = vsel %vm913, %v835, -1e+30
        %v927 = vsel %vm913, %v838, -1e+30
        %v928 = vsel %vm913, %v843, -1e+30
        %v929 = vsel %vm913, %v846, -1e+30
        %v930 = vsel %vm913, %v851, -1e+30
        %v931 = vsel %vm913, %v854, -1e+30
        %v932 = vsel %vm913, %v859, -1e+30
        %v933 = vsel %vm913, %v862, -1e+30
        %v934 = vsel %vm913, %v867, -1e+30
        %v935 = vsel %vm913, %v870, -1e+30
        %v936 = vsel %vm913, %v875, -1e+30
        %v937 = vsel %vm913, %v878, -1e+30
        %v938 = vsel %vm913, %v883, -1e+30
        %v939 = vsel %vm913, %v886, -1e+30
        %v940 = vsel %vm913, %v891, -1e+30
        %v941 = vsel %vm913, %v894, -1e+30
        %v942 = vsel %vm913, %v899, -1e+30
        %v943 = vsel %vm913, %v902, -1e+30
        %v944 = vsel %vm913, %v907, -1e+30
        %v945 = vsel %vm913, %v910, -1e+30
        %946 = vmax.xlane.f32.xlu0 %v914
        %v947 = vpop.xlane.xlu0 %946
        %948 = vmax.xlane.f32.xlu0 %v915
        %v949 = vpop.xlane.xlu0 %948
        %950 = vmax.xlane.f32.xlu0 %v916
        %v951 = vpop.xlane.xlu0 %950
        %952 = vmax.xlane.f32.xlu0 %v917
        %v953 = vpop.xlane.xlu0 %952
        %954 = vmax.xlane.f32.xlu0 %v918
        %v955 = vpop.xlane.xlu0 %954
        %956 = vmax.xlane.f32.xlu0 %v919
        %v957 = vpop.xlane.xlu0 %956
        %958 = vmax.xlane.f32.xlu0 %v920
        %v959 = vpop.xlane.xlu0 %958
        %960 = vmax.xlane.f32.xlu0 %v921
        %v961 = vpop.xlane.xlu0 %960
        %962 = vmax.xlane.f32.xlu0 %v922
        %v963 = vpop.xlane.xlu0 %962
        %964 = vmax.xlane.f32.xlu0 %v923
        %v965 = vpop.xlane.xlu0 %964
        %966 = vmax.xlane.f32.xlu0 %v924
        %v967 = vpop.xlane.xlu0 %966
        %968 = vmax.xlane.f32.xlu0 %v925
        %v969 = vpop.xlane.xlu0 %968
        %970 = vmax.xlane.f32.xlu0 %v926
        %v971 = vpop.xlane.xlu0 %970
        %972 = vmax.xlane.f32.xlu0 %v927
        %v973 = vpop.xlane.xlu0 %972
        %974 = vmax.xlane.f32.xlu0 %v928
        %v975 = vpop.xlane.xlu0 %974
        %976 = vmax.xlane.f32.xlu0 %v929
        %v977 = vpop.xlane.xlu0 %976
        %978 = vmax.xlane.f32.xlu0 %v930
        %v979 = vpop.xlane.xlu0 %978
        %980 = vmax.xlane.f32.xlu0 %v931
        %v981 = vpop.xlane.xlu0 %980
        %982 = vmax.xlane.f32.xlu0 %v932
        %v983 = vpop.xlane.xlu0 %982
        %984 = vmax.xlane.f32.xlu0 %v933
        %v985 = vpop.xlane.xlu0 %984
        %986 = vmax.xlane.f32.xlu0 %v934
        %v987 = vpop.xlane.xlu0 %986
        %988 = vmax.xlane.f32.xlu0 %v935
        %v989 = vpop.xlane.xlu0 %988
        %990 = vmax.xlane.f32.xlu0 %v936
        %v991 = vpop.xlane.xlu0 %990
        %992 = vmax.xlane.f32.xlu0 %v937
        %v993 = vpop.xlane.xlu0 %992
        %994 = vmax.xlane.f32.xlu0 %v938
        %v995 = vpop.xlane.xlu0 %994
        %996 = vmax.xlane.f32.xlu0 %v939
        %v997 = vpop.xlane.xlu0 %996
        %998 = vmax.xlane.f32.xlu0 %v940
        %v999 = vpop.xlane.xlu0 %998
        %1000 = vmax.xlane.f32.xlu0 %v941
        %v1001 = vpop.xlane.xlu0 %1000
        %1002 = vmax.xlane.f32.xlu0 %v942
        %v1003 = vpop.xlane.xlu0 %1002
        %1004 = vmax.xlane.f32.xlu0 %v943
        %v1005 = vpop.xlane.xlu0 %1004
        %1006 = vmax.xlane.f32.xlu0 %v944
        %v1007 = vpop.xlane.xlu0 %1006
        %1008 = vmax.xlane.f32.xlu0 %v945
        %v1009 = vpop.xlane.xlu0 %1008
        %v1010 = vsub.f32 %v914, %v947
        %v1011 = vsub.f32 %v915, %v949
        %v1012 = vsub.f32 %v916, %v951
        %v1013 = vsub.f32 %v917, %v953
        %v1014 = vsub.f32 %v918, %v955
        %v1015 = vsub.f32 %v919, %v957
        %v1016 = vsub.f32 %v920, %v959
        %v1017 = vsub.f32 %v921, %v961
        %v1018 = vsub.f32 %v922, %v963
        %v1019 = vsub.f32 %v923, %v965
        %v1020 = vsub.f32 %v924, %v967
        %v1021 = vsub.f32 %v925, %v969
        %v1022 = vsub.f32 %v926, %v971
        %v1023 = vsub.f32 %v927, %v973
        %v1024 = vsub.f32 %v928, %v975
        %v1025 = vsub.f32 %v929, %v977
        %v1026 = vsub.f32 %v930, %v979
        %v1027 = vsub.f32 %v931, %v981
        %v1028 = vsub.f32 %v932, %v983
        %v1029 = vsub.f32 %v933, %v985
        %v1030 = vsub.f32 %v934, %v987
        %v1031 = vsub.f32 %v935, %v989
        %v1032 = vsub.f32 %v936, %v991
        %v1033 = vsub.f32 %v937, %v993
        %v1034 = vsub.f32 %v938, %v995
        %v1035 = vsub.f32 %v939, %v997
        %v1036 = vsub.f32 %v940, %v999
        %v1037 = vsub.f32 %v941, %v1001
        %v1038 = vsub.f32 %v942, %v1003
        %v1039 = vsub.f32 %v943, %v1005
        %v1040 = vsub.f32 %v944, %v1007
        %v1041 = vsub.f32 %v945, %v1009
        %v1042 = vmul.f32 %v1010, 1.442695
        %v1043 = vpow.pop %v1042
        %v1044 = vmul.f32 %v1011, 1.442695
        %v1045 = vpow.pop %v1044
        %v1046 = vmul.f32 %v1012, 1.442695
        %v1047 = vpow.pop %v1046
        %v1048 = vmul.f32 %v1013, 1.442695
        %v1049 = vpow.pop %v1048
        %v1050 = vmul.f32 %v1014, 1.442695
        %v1051 = vpow.pop %v1050
        %v1052 = vmul.f32 %v1015, 1.442695
        %v1053 = vpow.pop %v1052
        %v1054 = vmul.f32 %v1016, 1.442695
        %v1055 = vpow.pop %v1054
        %v1056 = vmul.f32 %v1017, 1.442695
        %v1057 = vpow.pop %v1056
        %v1058 = vmul.f32 %v1018, 1.442695
        %v1059 = vpow.pop %v1058
        %v1060 = vmul.f32 %v1019, 1.442695
        %v1061 = vpow.pop %v1060
        %v1062 = vmul.f32 %v1020, 1.442695
        %v1063 = vpow.pop %v1062
        %v1064 = vmul.f32 %v1021, 1.442695
        %v1065 = vpow.pop %v1064
        %v1066 = vmul.f32 %v1022, 1.442695
        %v1067 = vpow.pop %v1066
        %v1068 = vmul.f32 %v1023, 1.442695
        %v1069 = vpow.pop %v1068
        %v1070 = vmul.f32 %v1024, 1.442695
        %v1071 = vpow.pop %v1070
        %v1072 = vmul.f32 %v1025, 1.442695
        %v1073 = vpow.pop %v1072
        %v1074 = vmul.f32 %v1026, 1.442695
        %v1075 = vpow.pop %v1074
        %v1076 = vmul.f32 %v1027, 1.442695
        %v1077 = vpow.pop %v1076
        %v1078 = vmul.f32 %v1028, 1.442695
        %v1079 = vpow.pop %v1078
        %v1080 = vmul.f32 %v1029, 1.442695
        %v1081 = vpow.pop %v1080
        %v1082 = vmul.f32 %v1030, 1.442695
        %v1083 = vpow.pop %v1082
        %v1084 = vmul.f32 %v1031, 1.442695
        %v1085 = vpow.pop %v1084
        %v1086 = vmul.f32 %v1032, 1.442695
        %v1087 = vpow.pop %v1086
        %v1088 = vmul.f32 %v1033, 1.442695
        %v1089 = vpow.pop %v1088
        %v1090 = vmul.f32 %v1034, 1.442695
        %v1091 = vpow.pop %v1090
        %v1092 = vmul.f32 %v1035, 1.442695
        %v1093 = vpow.pop %v1092
        %v1094 = vmul.f32 %v1036, 1.442695
        %v1095 = vpow.pop %v1094
        %v1096 = vmul.f32 %v1037, 1.442695
        %v1097 = vpow.pop %v1096
        %v1098 = vmul.f32 %v1038, 1.442695
        %v1099 = vpow.pop %v1098
        %v1100 = vmul.f32 %v1039, 1.442695
        %v1101 = vpow.pop %v1100
        %v1102 = vmul.f32 %v1040, 1.442695
        %v1103 = vpow.pop %v1102
        %v1104 = vmul.f32 %v1041, 1.442695
        %v1105 = vpow.pop %v1104
        %1106 = vadd.xlane.f32.xlu0 %v1043
        %v1107 = vpop.xlane.xlu0 %1106
        %1108 = vadd.xlane.f32.xlu0 %v1045
        %v1109 = vpop.xlane.xlu0 %1108
        %1110 = vadd.xlane.f32.xlu0 %v1047
        %v1111 = vpop.xlane.xlu0 %1110
        %1112 = vadd.xlane.f32.xlu0 %v1049
        %v1113 = vpop.xlane.xlu0 %1112
        %1114 = vadd.xlane.f32.xlu0 %v1051
        %v1115 = vpop.xlane.xlu0 %1114
        %1116 = vadd.xlane.f32.xlu0 %v1053
        %v1117 = vpop.xlane.xlu0 %1116
        %1118 = vadd.xlane.f32.xlu0 %v1055
        %v1119 = vpop.xlane.xlu0 %1118
        %1120 = vadd.xlane.f32.xlu0 %v1057
        %v1121 = vpop.xlane.xlu0 %1120
        %1122 = vadd.xlane.f32.xlu0 %v1059
        %v1123 = vpop.xlane.xlu0 %1122
        %1124 = vadd.xlane.f32.xlu0 %v1061
        %v1125 = vpop.xlane.xlu0 %1124
        %1126 = vadd.xlane.f32.xlu0 %v1063
        %v1127 = vpop.xlane.xlu0 %1126
        %1128 = vadd.xlane.f32.xlu0 %v1065
        %v1129 = vpop.xlane.xlu0 %1128
        %1130 = vadd.xlane.f32.xlu0 %v1067
        %v1131 = vpop.xlane.xlu0 %1130
        %1132 = vadd.xlane.f32.xlu0 %v1069
        %v1133 = vpop.xlane.xlu0 %1132
        %1134 = vadd.xlane.f32.xlu0 %v1071
        %v1135 = vpop.xlane.xlu0 %1134
        %1136 = vadd.xlane.f32.xlu0 %v1073
        %v1137 = vpop.xlane.xlu0 %1136
        %1138 = vadd.xlane.f32.xlu0 %v1075
        %v1139 = vpop.xlane.xlu0 %1138
        %1140 = vadd.xlane.f32.xlu0 %v1077
        %v1141 = vpop.xlane.xlu0 %1140
        %1142 = vadd.xlane.f32.xlu0 %v1079
        %v1143 = vpop.xlane.xlu0 %1142
        %1144 = vadd.xlane.f32.xlu0 %v1081
        %v1145 = vpop.xlane.xlu0 %1144
        %1146 = vadd.xlane.f32.xlu0 %v1083
        %v1147 = vpop.xlane.xlu0 %1146
        %1148 = vadd.xlane.f32.xlu0 %v1085
        %v1149 = vpop.xlane.xlu0 %1148
        %1150 = vadd.xlane.f32.xlu0 %v1087
        %v1151 = vpop.xlane.xlu0 %1150
        %1152 = vadd.xlane.f32.xlu0 %v1089
        %v1153 = vpop.xlane.xlu0 %1152
        %1154 = vadd.xlane.f32.xlu0 %v1091
        %v1155 = vpop.xlane.xlu0 %1154
        %1156 = vadd.xlane.f32.xlu0 %v1093
        %v1157 = vpop.xlane.xlu0 %1156
        %1158 = vadd.xlane.f32.xlu0 %v1095
        %v1159 = vpop.xlane.xlu0 %1158
        %1160 = vadd.xlane.f32.xlu0 %v1097
        %v1161 = vpop.xlane.xlu0 %1160
        %1162 = vadd.xlane.f32.xlu0 %v1099
        %v1163 = vpop.xlane.xlu0 %1162
        %1164 = vadd.xlane.f32.xlu0 %v1101
        %v1165 = vpop.xlane.xlu0 %1164
        %1166 = vadd.xlane.f32.xlu0 %v1103
        %v1167 = vpop.xlane.xlu0 %1166
        %1168 = vadd.xlane.f32.xlu0 %v1105
        %v1169 = vpop.xlane.xlu0 %1168
        %v1170 = vlog2.pop %v1107
        %v1171 = vmul.f32 %v1170, 0.6931472
        %v1172 = vlog2.pop %v1109
        %v1173 = vmul.f32 %v1172, 0.6931472
        %v1174 = vlog2.pop %v1111
        %v1175 = vmul.f32 %v1174, 0.6931472
        %v1176 = vlog2.pop %v1113
        %v1177 = vmul.f32 %v1176, 0.6931472
        %v1178 = vlog2.pop %v1115
        %v1179 = vmul.f32 %v1178, 0.6931472
        %v1180 = vlog2.pop %v1117
        %v1181 = vmul.f32 %v1180, 0.6931472
        %v1182 = vlog2.pop %v1119
        %v1183 = vmul.f32 %v1182, 0.6931472
        %v1184 = vlog2.pop %v1121
        %v1185 = vmul.f32 %v1184, 0.6931472
        %v1186 = vlog2.pop %v1123
        %v1187 = vmul.f32 %v1186, 0.6931472
        %v1188 = vlog2.pop %v1125
        %v1189 = vmul.f32 %v1188, 0.6931472
        %v1190 = vlog2.pop %v1127
        %v1191 = vmul.f32 %v1190, 0.6931472
        %v1192 = vlog2.pop %v1129
        %v1193 = vmul.f32 %v1192, 0.6931472
        %v1194 = vlog2.pop %v1131
        %v1195 = vmul.f32 %v1194, 0.6931472
        %v1196 = vlog2.pop %v1133
        %v1197 = vmul.f32 %v1196, 0.6931472
        %v1198 = vlog2.pop %v1135
        %v1199 = vmul.f32 %v1198, 0.6931472
        %v1200 = vlog2.pop %v1137
        %v1201 = vmul.f32 %v1200, 0.6931472
        %v1202 = vlog2.pop %v1139
        %v1203 = vmul.f32 %v1202, 0.6931472
        %v1204 = vlog2.pop %v1141
        %v1205 = vmul.f32 %v1204, 0.6931472
        %v1206 = vlog2.pop %v1143
        %v1207 = vmul.f32 %v1206, 0.6931472
        %v1208 = vlog2.pop %v1145
        %v1209 = vmul.f32 %v1208, 0.6931472
        %v1210 = vlog2.pop %v1147
        %v1211 = vmul.f32 %v1210, 0.6931472
        %v1212 = vlog2.pop %v1149
        %v1213 = vmul.f32 %v1212, 0.6931472
        %v1214 = vlog2.pop %v1151
        %v1215 = vmul.f32 %v1214, 0.6931472
        %v1216 = vlog2.pop %v1153
        %v1217 = vmul.f32 %v1216, 0.6931472
        %v1218 = vlog2.pop %v1155
        %v1219 = vmul.f32 %v1218, 0.6931472
        %v1220 = vlog2.pop %v1157
        %v1221 = vmul.f32 %v1220, 0.6931472
        %v1222 = vlog2.pop %v1159
        %v1223 = vmul.f32 %v1222, 0.6931472
        %v1224 = vlog2.pop %v1161
        %v1225 = vmul.f32 %v1224, 0.6931472
        %v1226 = vlog2.pop %v1163
        %v1227 = vmul.f32 %v1226, 0.6931472
        %v1228 = vlog2.pop %v1165
        %v1229 = vmul.f32 %v1228, 0.6931472
        %v1230 = vlog2.pop %v1167
        %v1231 = vmul.f32 %v1230, 0.6931472
        %v1232 = vlog2.pop %v1169
        %v1233 = vmul.f32 %v1232, 0.6931472
        %v1234 = vsub.f32 %v1010, %v1171
        %v1235 = vsub.f32 %v1011, %v1173
        %v1236 = vsub.f32 %v1012, %v1175
        %v1237 = vsub.f32 %v1013, %v1177
        %v1238 = vsub.f32 %v1014, %v1179
        %v1239 = vsub.f32 %v1015, %v1181
        %v1240 = vsub.f32 %v1016, %v1183
        %v1241 = vsub.f32 %v1017, %v1185
        %v1242 = vsub.f32 %v1018, %v1187
        %v1243 = vsub.f32 %v1019, %v1189
        %v1244 = vsub.f32 %v1020, %v1191
        %v1245 = vsub.f32 %v1021, %v1193
        %v1246 = vsub.f32 %v1022, %v1195
        %v1247 = vsub.f32 %v1023, %v1197
        %v1248 = vsub.f32 %v1024, %v1199
        %v1249 = vsub.f32 %v1025, %v1201
        %v1250 = vsub.f32 %v1026, %v1203
        %v1251 = vsub.f32 %v1027, %v1205
        %v1252 = vsub.f32 %v1028, %v1207
        %v1253 = vsub.f32 %v1029, %v1209
        %v1254 = vsub.f32 %v1030, %v1211
        %v1255 = vsub.f32 %v1031, %v1213
        %v1256 = vsub.f32 %v1032, %v1215
        %v1257 = vsub.f32 %v1033, %v1217
        %v1258 = vsub.f32 %v1034, %v1219
        %v1259 = vsub.f32 %v1035, %v1221
        %v1260 = vsub.f32 %v1036, %v1223
        %v1261 = vsub.f32 %v1037, %v1225
        %v1262 = vsub.f32 %v1038, %v1227
        %v1263 = vsub.f32 %v1039, %v1229
        %v1264 = vsub.f32 %v1040, %v1231
        %v1265 = vsub.f32 %v1041, %v1233
        %1266 = vst [vmem:[%s164] sm:$0xff] %v1234
        %1267 = vst [vmem:[%s164 + $0x8] sm:$0xff] %v1235
        %1268 = vst [vmem:[%s164 + $0x10] sm:$0xff] %v1236
        %1269 = vst [vmem:[%s164 + $0x18] sm:$0xff] %v1237
        %1270 = vst [vmem:[%s164 + $0x20] sm:$0xff] %v1238
        %1271 = vst [vmem:[%s164 + $0x28] sm:$0xff] %v1239
        %1272 = vst [vmem:[%s164 + $0x30] sm:$0xff] %v1240
        %1273 = vst [vmem:[%s164 + $0x38] sm:$0xff] %v1241
        %1274 = vst [vmem:[%s164 + $0x40] sm:$0xff] %v1242
        %1275 = vst [vmem:[%s164 + $0x48] sm:$0xff] %v1243
        %1276 = vst [vmem:[%s164 + $0x50] sm:$0xff] %v1244
        %1277 = vst [vmem:[%s164 + $0x58] sm:$0xff] %v1245
        %1278 = vst [vmem:[%s164 + $0x60] sm:$0xff] %v1246
        %1279 = vst [vmem:[%s164 + $0x68] sm:$0xff] %v1247
        %1280 = vst [vmem:[%s164 + $0x70] sm:$0xff] %v1248
        %1281 = vst [vmem:[%s164 + $0x78] sm:$0xff] %v1249
        %1282 = vst [vmem:[%s164 + $0x80] sm:$0xff] %v1250
        %1283 = vst [vmem:[%s164 + $0x88] sm:$0xff] %v1251
        %1284 = vst [vmem:[%s164 + $0x90] sm:$0xff] %v1252
        %1285 = vst [vmem:[%s164 + $0x98] sm:$0xff] %v1253
        %1286 = vst [vmem:[%s164 + $0xa0] sm:$0xff] %v1254
        %1287 = vst [vmem:[%s164 + $0xa8] sm:$0xff] %v1255
        %1288 = vst [vmem:[%s164 + $0xb0] sm:$0xff] %v1256
        %1289 = vst [vmem:[%s164 + $0xb8] sm:$0xff] %v1257
        %1290 = vst [vmem:[%s164 + $0xc0] sm:$0xff] %v1258
        %1291 = vst [vmem:[%s164 + $0xc8] sm:$0xff] %v1259
        %1292 = vst [vmem:[%s164 + $0xd0] sm:$0xff] %v1260
        %1293 = vst [vmem:[%s164 + $0xd8] sm:$0xff] %v1261
        %1294 = vst [vmem:[%s164 + $0xe0] sm:$0xff] %v1262
        %1295 = vst [vmem:[%s164 + $0xe8] sm:$0xff] %v1263
        %1296 = vst [vmem:[%s164 + $0xf0] sm:$0xff] %v1264
        %1297 = vst [vmem:[%s164 + $0xf8] sm:$0xff] %v1265
        %s1298 = sand.u32 %s93, 1
        %s1299 = scalar_lea.sflag [#allocation3], %s1298
        %s1300 = sand.u32 %s93, 1
        %s1301 = smul.addr %s1300, 256
        %s1302 = scalar_lea.vmem [#allocation2], %s1301
        // Predicated region
        $region33: #{skipgram_forward_padded.1} parent=31 // pred_check
          %p1303 = pneg %p103
        $region34: #{skipgram_forward_padded.1} parent=31 // pred_check_branch
          %1305 = sbr.rel (%p1303) target = $region36
        $region35: #{skipgram_forward_padded.1} parent=31 // pred_region
          %s1306 = smul.u32 32, %s17
          %s1308 = ssub.s32 4096, 4096
          %1309 = vsyncadd %s1299, %s1308
          %s1310 = smul.addr %s1306, 128
          %s1311 = scalar_lea.hbm %s3, %s1310
          %s1312 = sshll.u32 %s1302, 4
          %s1313 = int_to_ptr.vmem [resolvable:$true] %s1312
          %1318 = dma.vmem_to_hbm [thread:$0]  %s1313, 4096, %s1311, %s1299, 128, 128, 8
        $region36: #{skipgram_forward_padded.1} parent=31 // pred_fallthru
          _
      $region32: #{skipgram_forward_padded.1} parent=5 // pred_fallthru
        _
      %p1319 = scmp.le.s32.totalorder 2, %s12
      // Predicated region
      $region37: #{skipgram_forward_padded.1} parent=5 // pred_check
        %p1320 = pneg %p1319
      $region38: #{skipgram_forward_padded.1} parent=5 // pred_check_branch
        %1322 = sbr.rel (%p1320) target = $region40
      $region39: #{skipgram_forward_padded.1} parent=5 // pred_region
        %s1323 = ssub.s32 %s12, 2
        // Predicated region
        $region41: #{skipgram_forward_padded.1} parent=39 // pred_check
          %p1324 = pneg %p109
        $region42: #{skipgram_forward_padded.1} parent=39 // pred_check_branch
          %1326 = sbr.rel (%p1324) target = $region44
        $region43: #{skipgram_forward_padded.1} parent=39 // pred_region
          %s1327 = sand.u32 %s94, 1
          %s1328 = scalar_lea.sflag [#allocation3], %s1327
          %s1329 = sand.u32 %s94, 1
          %s1330 = smul.addr %s1329, 256
          %s1331 = scalar_lea.vmem [#allocation2], %s1330
          %1332 = dma.done %s1328, 4096
        $region44: #{skipgram_forward_padded.1} parent=39 // pred_fallthru
          _
      $region40: #{skipgram_forward_padded.1} parent=5 // pred_fallthru
        _
    $region6: #{skipgram_forward_padded.1} parent=1 // loop_footer
      %s16 = sadd.s32 1, %s12
    $region7: #{skipgram_forward_padded.1} parent=1 // loop_footer_branch
      %11 = sbr.rel target = $region3
    $region8: #{skipgram_forward_padded.1} parent=1 // loop_exit
      _
    %1333 = vsyncpa [#allocation3], 1
    %s1334 = scalar_lea.sflag [#allocation3], 1
    %1335 = vsyncpa %s1334, 1

</llo_original>
